<compile_context>
chip_gen: v5e
topology: v5e:2x2
jax: 0.10.0
libtpu: 0.0.40
codegen_flags: <defaults>
</compile_context>

<pallas_src>
import jax
import jax.numpy as jnp
from jax.experimental import pallas as pl
from jax.experimental.pallas import tpu as pltpu


def fam_forward(x, *, target_block_bytes=2 * 1024 * 1024, max_frames_per_block=None):
    """x: (T, C, W, H) -> (T, C, W, H), matching the PyTorch Fam module."""
    T, C, W, H = x.shape
    if T == 0:
        return x
    S = W * H
    dtype = x.dtype
    bpf = C * S * dtype.itemsize  # bytes per frame

    # ---- byte-sized frame blocking -------------------------------------------
    TB = max(1, min(T, target_block_bytes // bpf))
    if max_frames_per_block is not None:
        TB = max(1, min(TB, max_frames_per_block))
    TB = int(TB)
    nb = -(-T // TB)  # cdiv; last block may be ragged (handled in-kernel)

    blk_bytes = TB * bpf
    scratch_bytes = (TB + 1) * S * 4
    # 2x double-buffered input blocks + output blocks, boundary frame, scratch,
    # plus headroom for Mosaic internal scratch.
    vmem_need = 4 * blk_bytes + 2 * bpf + scratch_bytes + (2 << 20)
    compiler_kwargs = {}
    if vmem_need > (14 << 20):  # beyond v5e's 16 MiB scoped default
        # Cap at 48 MiB so the request remains safe on v7x (64 MiB physical);
        # v5e/v6e have 128 MiB physical so this is always in range there.
        # TODO(synk): frames larger than ~11 MiB each would need spatial tiling.
        compiler_kwargs["vmem_limit_bytes"] = int(min(vmem_need, 48 << 20))

    inv_c = 1.0 / C

    # Free reshape (collapses contiguous minor dims): no HBM copy.
    # TODO(synk): if S % 128 != 0 the stores become masked (vst.msk); a lane-pad
    # of S could trade one extra copy for dense stores.
    xf = x.reshape(T, C, S)

    def _chan_mean_f32(v):
        # v: (tb, C, S) -> (tb, S) channel mean, accumulated in f32.
        return jnp.sum(v, axis=1, dtype=jnp.float32) * inv_c

    def kernel(x_ref, xb_ref, out_ref, mbuf_ref):
        # x_ref:  (TB, C, S) frames i*TB .. i*TB+TB-1 (last block may be ragged)
        # xb_ref: (1, C, S)  frame min((i+1)*TB, T-1)  (boundary / "next" frame)
        # mbuf_ref: (TB+1, S) f32 scratch used to build the one-frame shift.
        i = pl.program_id(0)

        x = x_ref[...]                                   # (TB, C, S)
        means = _chan_mean_f32(x)                        # (TB, S) f32
        bmean = _chan_mean_f32(xb_ref[...])              # (1, S)  f32

        # Stage: rows 0..TB-1 = this block's means, row TB = boundary mean;
        # rows 1..TB are then exactly the "frame t+1" mean maps.
        mbuf_ref[pl.ds(0, TB), :] = means
        mbuf_ref[pl.ds(TB, 1), :] = bmean
        nxt = mbuf_ref[pl.ds(1, TB), :]                  # (TB, S) f32

        att = jax.nn.sigmoid(jnp.abs(nxt - means))       # (TB, S) f32

        # The last real frame (global index T-1) passes through unchanged.
        # Ragged-tail rows (global index >= T) never match and are dropped by
        # the clipped writeback, so their (garbage) values are irrelevant.
        gframe = i * TB + jax.lax.broadcasted_iota(jnp.int32, (TB, 1), 0)
        att = jnp.where(gframe == T - 1, jnp.float32(1.0), att)

        out_ref[...] = (x * att[:, None, :].astype(x.dtype)).astype(out_ref.dtype)

    out = pl.pallas_call(
        kernel,
        out_shape=jax.ShapeDtypeStruct((T, C, S), dtype),
        grid_spec=pltpu.PrefetchScalarGridSpec(
            num_scalar_prefetch=0,
            grid=(nb,),
            in_specs=[
                pl.BlockSpec((TB, C, S), lambda i: (i, 0, 0)),
                # Boundary frame = first frame of the next block, clamped to the
                # last real frame (whose att is forced to 1 anyway).
                pl.BlockSpec((1, C, S),
                             lambda i: (jnp.minimum((i + 1) * TB, T - 1), 0, 0)),
            ],
            out_specs=pl.BlockSpec((TB, C, S), lambda i: (i, 0, 0)),
            scratch_shapes=[pltpu.VMEM((TB + 1, S), jnp.float32)],
        ),
        compiler_params=pltpu.CompilerParams(
            # No cross-step carry -> safe to shard across TensorCores (v7x).
            dimension_semantics=("parallel",),
            **compiler_kwargs,
        ),
    )(xf, xf)

    return out.reshape(T, C, W, H)


def fam_reference(x):
    """Pure-JAX reference mirroring the PyTorch module."""
    T, C, W, H = x.shape
    o1 = x[: T - 1]
    o2 = x[1:]
    map1 = jnp.sum(o1, axis=1) / C
    map2 = jnp.sum(o2, axis=1) / C
    att = jax.nn.sigmoid(jnp.abs(map2 - map1))[:, None, :, :]
    return jnp.concatenate([o1 * att, x[T - 1:]], axis=0)


if __name__ == "__main__":
    key = jax.random.PRNGKey(0)
    T, C, W, H = 10, 4, 16, 16
    x = jax.random.normal(key, (T, C, W, H), dtype=jnp.float32)
    ref = fam_reference(x)

    # Default byte-sized blocking: here the whole clip fits one block (TB = T).
    out1 = jax.block_until_ready(fam_forward(x))
    # Forced small blocks: exercises the clamped boundary-frame input, multiple
    # grid steps, and the ragged (T % TB != 0) last block with clipped writeback.
    out2 = jax.block_until_ready(fam_forward(x, max_frames_per_block=4))

    assert out1.shape == (T, C, W, H)
    assert out2.shape == (T, C, W, H)
    assert jnp.allclose(out1, ref, atol=1e-5, rtol=1e-5)
    assert jnp.allclose(out2, ref, atol=1e-5, rtol=1e-5)

    print("KERNEL_OK")
</pallas_src>

<mosaic_0001>
module attributes {stable_mosaic.version = 11 : i64} {
  func.func @kernel(%arg0: i32, %arg1: memref<10x4x256xf32, #tpu.memory_space<vmem>>, %arg2: memref<1x4x256xf32, #tpu.memory_space<vmem>>, %arg3: memref<10x4x256xf32, #tpu.memory_space<vmem>>, %arg4: memref<11x256xf32, #tpu.memory_space<vmem>>) attributes {dimension_semantics = [#tpu.dimension_semantics<parallel>], iteration_bounds = array<i64: 1>, scalar_prefetch = 0 : i64, scratch_operands = 1 : i64, tpu.core_type = #tpu.core_type<tc>, window_params = [{transform_indices = @transform_0, window_bounds = array<i64: 10, 4, 256>}, {transform_indices = @transform_1, window_bounds = array<i64: 1, 4, 256>}, {transform_indices = @transform_2, window_bounds = array<i64: 10, 4, 256>}]} {
    %c0 = arith.constant 0 : index
    %c0_0 = arith.constant 0 : index
    %c0_1 = arith.constant 0 : index
    %0 = vector.load %arg1[%c0, %c0_0, %c0_1] : memref<10x4x256xf32, #tpu.memory_space<vmem>>, vector<10x4x256xf32>
    %cst = arith.constant dense<0.000000e+00> : vector<10x256xf32>
    %1 = vector.multi_reduction <add>, %0, %cst [1] : vector<10x4x256xf32> to vector<10x256xf32>
    %cst_2 = arith.constant 2.500000e-01 : f32
    %2 = vector.broadcast %cst_2 : f32 to vector<10x256xf32>
    %3 = arith.mulf %1, %2 : vector<10x256xf32>
    %c0_3 = arith.constant 0 : index
    %c0_4 = arith.constant 0 : index
    %c0_5 = arith.constant 0 : index
    %4 = vector.load %arg2[%c0_3, %c0_4, %c0_5] : memref<1x4x256xf32, #tpu.memory_space<vmem>>, vector<1x4x256xf32>
    %cst_6 = arith.constant dense<0.000000e+00> : vector<1x256xf32>
    %5 = vector.multi_reduction <add>, %4, %cst_6 [1] : vector<1x4x256xf32> to vector<1x256xf32>
    %cst_7 = arith.constant 2.500000e-01 : f32
    %6 = vector.broadcast %cst_7 : f32 to vector<1x256xf32>
    %7 = arith.mulf %5, %6 : vector<1x256xf32>
    %c0_8 = arith.constant 0 : index
    %c0_9 = arith.constant 0 : index
    %8 = vector.load %arg4[%c0_8, %c0_9] : memref<11x256xf32, #tpu.memory_space<vmem>>, vector<10x256xf32>
    tpu.vector_store %arg4[%c0_8, %c0_9], %3 {strides = array<i32>} : memref<11x256xf32, #tpu.memory_space<vmem>>, vector<10x256xf32>,
    %c10 = arith.constant 10 : index
    %c0_10 = arith.constant 0 : index
    %9 = vector.load %arg4[%c10, %c0_10] : memref<11x256xf32, #tpu.memory_space<vmem>>, vector<1x256xf32>
    tpu.vector_store %arg4[%c10, %c0_10], %7 {strides = array<i32>} : memref<11x256xf32, #tpu.memory_space<vmem>>, vector<1x256xf32>,
    %c1 = arith.constant 1 : index
    %c0_11 = arith.constant 0 : index
    %10 = vector.load %arg4[%c1, %c0_11] : memref<11x256xf32, #tpu.memory_space<vmem>>, vector<10x256xf32>
    %11 = arith.subf %10, %3 : vector<10x256xf32>
    %12 = math.absf %11 : vector<10x256xf32>
    %13 = arith.negf %12 : vector<10x256xf32>
    %14 = math.exp %13 : vector<10x256xf32>
    %cst_12 = arith.constant 1.000000e+00 : f32
    %15 = vector.broadcast %cst_12 : f32 to vector<10x256xf32>
    %16 = arith.addf %15, %14 : vector<10x256xf32>
    %17 = arith.divf %15, %16 : vector<10x256xf32>
    %c10_i32 = arith.constant 10 : i32
    %18 = arith.muli %arg0, %c10_i32 : i32
    %19 = tpu.iota {dimensions = array<i32: 0>} : vector<10x1xi32>
    %20 = vector.broadcast %18 : i32 to vector<10x1xi32>
    %21 = arith.addi %20, %19 : vector<10x1xi32>
    %c9_i32 = arith.constant 9 : i32
    %22 = vector.broadcast %c9_i32 : i32 to vector<10x1xi32>
    %23 = arith.cmpi eq, %21, %22 : vector<10x1xi32>
    %cst_13 = arith.constant 1.000000e+00 : f32
    %24 = vector.shape_cast %23 : vector<10x1xi1> to vector<10x1xi1>
    %25 = vector.broadcast %24 : vector<10x1xi1> to vector<10x256xi1>
    %26 = vector.broadcast %cst_13 : f32 to vector<10x256xf32>
    %27 = arith.select %25, %26, %17 : vector<10x256xi1>, vector<10x256xf32>
    %28 = vector.shape_cast %27 : vector<10x256xf32> to vector<10x1x256xf32>
    %29 = vector.broadcast %28 : vector<10x1x256xf32> to vector<10x4x256xf32>
    %30 = arith.mulf %0, %29 : vector<10x4x256xf32>
    %c0_14 = arith.constant 0 : index
    %c0_15 = arith.constant 0 : index
    %c0_16 = arith.constant 0 : index
    %31 = vector.load %arg3[%c0_14, %c0_15, %c0_16] : memref<10x4x256xf32, #tpu.memory_space<vmem>>, vector<10x4x256xf32>
    tpu.vector_store %arg3[%c0_14, %c0_15, %c0_16], %30 {strides = array<i32>} : memref<10x4x256xf32, #tpu.memory_space<vmem>>, vector<10x4x256xf32>,
    return
  }
  func.func @transform_0(%arg0: i32) -> (i32, i32, i32) {
    %c0_i32 = arith.constant 0 : i32
    %c0_i32_0 = arith.constant 0 : i32
    %c0_i32_1 = arith.constant 0 : i32
    return %arg0, %c0_i32, %c0_i32_0 : i32, i32, i32
  }
  func.func @transform_1(%arg0: i32) -> (i32, i32, i32) {
    %c1_i32 = arith.constant 1 : i32
    %0 = arith.addi %arg0, %c1_i32 : i32
    %c10_i32 = arith.constant 10 : i32
    %1 = arith.muli %0, %c10_i32 : i32
    %c9_i32 = arith.constant 9 : i32
    %2 = arith.minsi %1, %c9_i32 : i32
    %c0_i32 = arith.constant 0 : i32
    %c0_i32_0 = arith.constant 0 : i32
    %c0_i32_1 = arith.constant 0 : i32
    return %2, %c0_i32, %c0_i32_0 : i32, i32, i32
  }
  func.func @transform_2(%arg0: i32) -> (i32, i32, i32) {
    %c0_i32 = arith.constant 0 : i32
    %c0_i32_0 = arith.constant 0 : i32
    %c0_i32_1 = arith.constant 0 : i32
    return %arg0, %c0_i32, %c0_i32_0 : i32, i32, i32
  }
}

</mosaic_0001>

<llo_original>
// kernel: tpu_custom_call.1
$region0: #{tpu_custom_call.1}
  #allocation0 [shape = 'u32[]', space=smem, size = 0x4, offset = 0x4, fixed_abs, tag = 'smem constant byte address 0x4 - core index']
  #allocation1 [shape = 'u32[72,128]{1,0:T(1,128)}', space=vmem, size = 0x9000, scoped, tag = 'internal scratch']
  #allocation2 [shape = 'f32[11,256]{1,0:T(8,128)}', space=vmem, size = 0x4000, scoped, tag = 'scratch operand']
  %s0 = inlined_call_operand.hbm [shape: f32[10,4,256], index: 0, kind: input, shape index: {}]
  %s1 = inlined_call_operand.hbm [shape: f32[10,4,256], index: 1, kind: input, shape index: {}]
  %s2 = inlined_call_operand.hbm [shape: f32[10,4,256], index: 2, kind: output, shape index: {}]
  %s3 = sld [smem:[#allocation0]]
  $region26: #{tpu_custom_call.1} parent=0
    _
  %s5 = ssub.s32 1, %s3
  %s6 = scalar_select 0, %s5, %s3
  $region1: #{tpu_custom_call.1} parent=0
    #allocation3 [shape = 'u8[40960]{0}', space=vmem, size = 0xa000, scoped, tag = 'input window, operand 0, single buffered']
    #allocation4 [shape = 's32[1]{0}', space=sflag, size = 0x4, scoped, tag = 'scoped memory for tpu_custom_call.1']
    #allocation5 [shape = 's32[1]{0}', space=sflag, size = 0x4, scoped, tag = 'scoped memory for tpu_custom_call.1']
    #allocation6 [shape = 'u8[4096]{0}', space=vmem, size = 0x1000, scoped, tag = 'input window, operand 1, single buffered']
    #allocation7 [shape = 's32[1]{0}', space=sflag, size = 0x4, scoped, tag = 'scoped memory for tpu_custom_call.1']
    #allocation8 [shape = 'u8[40960]{0}', space=vmem, size = 0xa000, scoped, tag = 'output window, operand 0, single buffered']
    %7 = vsyncpa [#allocation4], 0
    %8 = vsyncpa [#allocation7], 0
    %9 = vsyncpa [#allocation5], 0
    // Predicated region
    $region2: #{tpu_custom_call.1} parent=1 // pred_check
      _
    $region3: #{tpu_custom_call.1} parent=1 // pred_check_branch
      %11 = sbr.rel (0) target = $region5
    $region4: #{tpu_custom_call.1} parent=1 // pred_region
      %13 = vsyncadd [#allocation4], 0
      %s14 = sshll.u32 %s0, 4
      %s15 = int_to_ptr.hbm [resolvable:$true] %s14
      %s16 = sshll.u32 [#allocation3], 4
      %s17 = int_to_ptr.vmem [resolvable:$true] %s16
      %22 = dma.hbm_to_vmem [thread:$0]  %s15, 1280, %s17, [#allocation4], 128, 128, 8
    $region5: #{tpu_custom_call.1} parent=1 // pred_fallthru
      _
    // Predicated region
    $region6: #{tpu_custom_call.1} parent=1 // pred_check
      _
    $region7: #{tpu_custom_call.1} parent=1 // pred_check_branch
      %24 = sbr.rel (0) target = $region9
    $region8: #{tpu_custom_call.1} parent=1 // pred_region
      %s25 = sadd.s32 0, 1
      %s26 = smul.u32 %s25, 10
      %p27 = scmp.lt.s32.totalorder %s26, 9
      %s28 = scalar_select %p27, %s26, 9
      %30 = vsyncadd [#allocation7], 0
      %s31 = smul.addr %s28, 2
      %s32 = smul.addr %s31, 4
      %s33 = scalar_lea.hbm %s1, %s32
      %s35 = sshll.u32 %s33, 4
      %s36 = int_to_ptr.hbm [resolvable:$true] %s35
      %s37 = sshll.u32 [#allocation6], 4
      %s38 = int_to_ptr.vmem [resolvable:$true] %s37
      %40 = dma.hbm_to_vmem [thread:$0]  %s36, 128, %s38, [#allocation7]
    $region9: #{tpu_custom_call.1} parent=1 // pred_fallthru
      _
    // Predicated region
    $region10: #{tpu_custom_call.1} parent=1 // pred_check
      _
    $region11: #{tpu_custom_call.1} parent=1 // pred_check_branch
      %42 = sbr.rel (0) target = $region13
    $region12: #{tpu_custom_call.1} parent=1 // pred_region
      %44 = dma.done [#allocation4], 1280
    $region13: #{tpu_custom_call.1} parent=1 // pred_fallthru
      _
    // Predicated region
    $region14: #{tpu_custom_call.1} parent=1 // pred_check
      _
    $region15: #{tpu_custom_call.1} parent=1 // pred_check_branch
      %46 = sbr.rel (0) target = $region17
    $region16: #{tpu_custom_call.1} parent=1 // pred_region
      %48 = dma.done [#allocation7], 128
    $region17: #{tpu_custom_call.1} parent=1 // pred_fallthru
      _
    %s49 = sadd.s32 0, 1
    %s50 = smul.u32 %s49, 10
    %p51 = scmp.lt.s32.totalorder %s50, 9
    %s52 = scalar_select %p51, %s50, 9
    %v53 = vld [vmem:[#allocation3] sm:$0xff]
    %v54 = vld [vmem:[#allocation3 + $0x8] sm:$0xff]
    %v55 = vld [vmem:[#allocation3 + $0x10] sm:$0xff]
    %v56 = vld [vmem:[#allocation3 + $0x18] sm:$0xff]
    %v57 = vld [vmem:[#allocation3 + $0x20] sm:$0xff]
    %v58 = vld [vmem:[#allocation3 + $0x28] sm:$0xff]
    %v59 = vld [vmem:[#allocation3 + $0x30] sm:$0xff]
    %v60 = vld [vmem:[#allocation3 + $0x38] sm:$0xff]
    %v61 = vld [vmem:[#allocation3 + $0x40] sm:$0xff]
    %v62 = vld [vmem:[#allocation3 + $0x48] sm:$0xff]
    %73 = vst [vmem:[#allocation1] ss:$2 sm:$0xff] %v53
    %v74 = vld.sshfl [vmem:[#allocation1] sm:$0xff pattern:$0x75316420]
    %v75 = vld.sshfl [vmem:[#allocation1 + $0x8] sm:$0xff pattern:$0x75316420]
    %s76 = scalar_lea.vmem [#allocation1], 16
    %77 = vst [vmem:[%s76] ss:$2 sm:$0xff] %v54
    %v78 = vld.sshfl [vmem:[#allocation1 + $0x10] sm:$0xff pattern:$0x75316420]
    %v79 = vld.sshfl [vmem:[#allocation1 + $0x18] sm:$0xff pattern:$0x75316420]
    %s80 = scalar_lea.vmem [#allocation1], 32
    %81 = vst [vmem:[%s80] ss:$2 sm:$0xff] %v55
    %v82 = vld.sshfl [vmem:[#allocation1 + $0x20] sm:$0xff pattern:$0x75316420]
    %v83 = vld.sshfl [vmem:[#allocation1 + $0x28] sm:$0xff pattern:$0x75316420]
    %s84 = scalar_lea.vmem [#allocation1], 48
    %85 = vst [vmem:[%s84] ss:$2 sm:$0xff] %v56
    %v86 = vld.sshfl [vmem:[#allocation1 + $0x30] sm:$0xff pattern:$0x75316420]
    %v87 = vld.sshfl [vmem:[#allocation1 + $0x38] sm:$0xff pattern:$0x75316420]
    %88 = vst [vmem:[#allocation1] ss:$2 sm:$0xff] %v57
    %v89 = vld.sshfl [vmem:[#allocation1] sm:$0xff pattern:$0x75316420]
    %v90 = vld.sshfl [vmem:[#allocation1 + $0x8] sm:$0xff pattern:$0x75316420]
    %91 = vst [vmem:[%s76] ss:$2 sm:$0xff] %v58
    %v92 = vld.sshfl [vmem:[#allocation1 + $0x10] sm:$0xff pattern:$0x75316420]
    %v93 = vld.sshfl [vmem:[#allocation1 + $0x18] sm:$0xff pattern:$0x75316420]
    %94 = vst [vmem:[%s80] ss:$2 sm:$0xff] %v59
    %v95 = vld.sshfl [vmem:[#allocation1 + $0x20] sm:$0xff pattern:$0x75316420]
    %v96 = vld.sshfl [vmem:[#allocation1 + $0x28] sm:$0xff pattern:$0x75316420]
    %97 = vst [vmem:[%s84] ss:$2 sm:$0xff] %v60
    %v98 = vld.sshfl [vmem:[#allocation1 + $0x30] sm:$0xff pattern:$0x75316420]
    %v99 = vld.sshfl [vmem:[#allocation1 + $0x38] sm:$0xff pattern:$0x75316420]
    %100 = vst [vmem:[#allocation1] ss:$2 sm:$0xff] %v61
    %v101 = vld.sshfl [vmem:[#allocation1] sm:$0xff pattern:$0x75316420]
    %v102 = vld.sshfl [vmem:[#allocation1 + $0x8] sm:$0xff pattern:$0x75316420]
    %103 = vst [vmem:[%s76] ss:$2 sm:$0xff] %v62
    %v104 = vld.sshfl [vmem:[#allocation1 + $0x10] sm:$0xff pattern:$0x75316420]
    %v105 = vld.sshfl [vmem:[#allocation1 + $0x18] sm:$0xff pattern:$0x75316420]
    %vm126 = vcmask 1043456
    %v127 = vsel %vm126, %v74, 0.0
    %v128 = vrot.slane %v127, 4
    %v129 = vadd.f32 %v127, %v128
    %v130 = vrot.slane %v129, 2
    %v131 = vadd.f32 %v129, %v130
    %v132 = vrot.slane %v131, 1
    %v133 = vadd.f32 %v131, %v132
    %v134 = vsel %vm126, %v75, 0.0
    %v135 = vrot.slane %v134, 4
    %v136 = vadd.f32 %v134, %v135
    %v137 = vrot.slane %v136, 2
    %v138 = vadd.f32 %v136, %v137
    %v139 = vrot.slane %v138, 1
    %v140 = vadd.f32 %v138, %v139
    %v141 = vsel %vm126, %v78, 0.0
    %v142 = vrot.slane %v141, 4
    %v143 = vadd.f32 %v141, %v142
    %v144 = vrot.slane %v143, 2
    %v145 = vadd.f32 %v143, %v144
    %v146 = vrot.slane %v145, 1
    %v147 = vadd.f32 %v145, %v146
    %v148 = vsel %vm126, %v79, 0.0
    %v149 = vrot.slane %v148, 4
    %v150 = vadd.f32 %v148, %v149
    %v151 = vrot.slane %v150, 2
    %v152 = vadd.f32 %v150, %v151
    %v153 = vrot.slane %v152, 1
    %v154 = vadd.f32 %v152, %v153
    %v155 = vsel %vm126, %v82, 0.0
    %v156 = vrot.slane %v155, 4
    %v157 = vadd.f32 %v155, %v156
    %v158 = vrot.slane %v157, 2
    %v159 = vadd.f32 %v157, %v158
    %v160 = vrot.slane %v159, 1
    %v161 = vadd.f32 %v159, %v160
    %v162 = vsel %vm126, %v83, 0.0
    %v163 = vrot.slane %v162, 4
    %v164 = vadd.f32 %v162, %v163
    %v165 = vrot.slane %v164, 2
    %v166 = vadd.f32 %v164, %v165
    %v167 = vrot.slane %v166, 1
    %v168 = vadd.f32 %v166, %v167
    %v169 = vsel %vm126, %v86, 0.0
    %v170 = vrot.slane %v169, 4
    %v171 = vadd.f32 %v169, %v170
    %v172 = vrot.slane %v171, 2
    %v173 = vadd.f32 %v171, %v172
    %v174 = vrot.slane %v173, 1
    %v175 = vadd.f32 %v173, %v174
    %v176 = vsel %vm126, %v87, 0.0
    %v177 = vrot.slane %v176, 4
    %v178 = vadd.f32 %v176, %v177
    %v179 = vrot.slane %v178, 2
    %v180 = vadd.f32 %v178, %v179
    %v181 = vrot.slane %v180, 1
    %v182 = vadd.f32 %v180, %v181
    %v183 = vsel %vm126, %v89, 0.0
    %v184 = vrot.slane %v183, 4
    %v185 = vadd.f32 %v183, %v184
    %v186 = vrot.slane %v185, 2
    %v187 = vadd.f32 %v185, %v186
    %v188 = vrot.slane %v187, 1
    %v189 = vadd.f32 %v187, %v188
    %v190 = vsel %vm126, %v90, 0.0
    %v191 = vrot.slane %v190, 4
    %v192 = vadd.f32 %v190, %v191
    %v193 = vrot.slane %v192, 2
    %v194 = vadd.f32 %v192, %v193
    %v195 = vrot.slane %v194, 1
    %v196 = vadd.f32 %v194, %v195
    %v197 = vsel %vm126, %v92, 0.0
    %v198 = vrot.slane %v197, 4
    %v199 = vadd.f32 %v197, %v198
    %v200 = vrot.slane %v199, 2
    %v201 = vadd.f32 %v199, %v200
    %v202 = vrot.slane %v201, 1
    %v203 = vadd.f32 %v201, %v202
    %v204 = vsel %vm126, %v93, 0.0
    %v205 = vrot.slane %v204, 4
    %v206 = vadd.f32 %v204, %v205
    %v207 = vrot.slane %v206, 2
    %v208 = vadd.f32 %v206, %v207
    %v209 = vrot.slane %v208, 1
    %v210 = vadd.f32 %v208, %v209
    %v211 = vsel %vm126, %v95, 0.0
    %v212 = vrot.slane %v211, 4
    %v213 = vadd.f32 %v211, %v212
    %v214 = vrot.slane %v213, 2
    %v215 = vadd.f32 %v213, %v214
    %v216 = vrot.slane %v215, 1
    %v217 = vadd.f32 %v215, %v216
    %v218 = vsel %vm126, %v96, 0.0
    %v219 = vrot.slane %v218, 4
    %v220 = vadd.f32 %v218, %v219
    %v221 = vrot.slane %v220, 2
    %v222 = vadd.f32 %v220, %v221
    %v223 = vrot.slane %v222, 1
    %v224 = vadd.f32 %v222, %v223
    %v225 = vsel %vm126, %v98, 0.0
    %v226 = vrot.slane %v225, 4
    %v227 = vadd.f32 %v225, %v226
    %v228 = vrot.slane %v227, 2
    %v229 = vadd.f32 %v227, %v228
    %v230 = vrot.slane %v229, 1
    %v231 = vadd.f32 %v229, %v230
    %v232 = vsel %vm126, %v99, 0.0
    %v233 = vrot.slane %v232, 4
    %v234 = vadd.f32 %v232, %v233
    %v235 = vrot.slane %v234, 2
    %v236 = vadd.f32 %v234, %v235
    %v237 = vrot.slane %v236, 1
    %v238 = vadd.f32 %v236, %v237
    %v239 = vsel %vm126, %v101, 0.0
    %v240 = vrot.slane %v239, 4
    %v241 = vadd.f32 %v239, %v240
    %v242 = vrot.slane %v241, 2
    %v243 = vadd.f32 %v241, %v242
    %v244 = vrot.slane %v243, 1
    %v245 = vadd.f32 %v243, %v244
    %v246 = vsel %vm126, %v102, 0.0
    %v247 = vrot.slane %v246, 4
    %v248 = vadd.f32 %v246, %v247
    %v249 = vrot.slane %v248, 2
    %v250 = vadd.f32 %v248, %v249
    %v251 = vrot.slane %v250, 1
    %v252 = vadd.f32 %v250, %v251
    %v253 = vsel %vm126, %v104, 0.0
    %v254 = vrot.slane %v253, 4
    %v255 = vadd.f32 %v253, %v254
    %v256 = vrot.slane %v255, 2
    %v257 = vadd.f32 %v255, %v256
    %v258 = vrot.slane %v257, 1
    %v259 = vadd.f32 %v257, %v258
    %v260 = vsel %vm126, %v105, 0.0
    %v261 = vrot.slane %v260, 4
    %v262 = vadd.f32 %v260, %v261
    %v263 = vrot.slane %v262, 2
    %v264 = vadd.f32 %v262, %v263
    %v265 = vrot.slane %v264, 1
    %v266 = vadd.f32 %v264, %v265
    %v267 = vmul.f32 %v133, 0.25
    %v268 = vmul.f32 %v140, 0.25
    %v269 = vmul.f32 %v147, 0.25
    %v270 = vmul.f32 %v154, 0.25
    %v271 = vmul.f32 %v161, 0.25
    %v272 = vmul.f32 %v168, 0.25
    %v273 = vmul.f32 %v175, 0.25
    %v274 = vmul.f32 %v182, 0.25
    %v275 = vmul.f32 %v189, 0.25
    %v276 = vmul.f32 %v196, 0.25
    %v277 = vmul.f32 %v203, 0.25
    %v278 = vmul.f32 %v210, 0.25
    %v279 = vmul.f32 %v217, 0.25
    %v280 = vmul.f32 %v224, 0.25
    %v281 = vmul.f32 %v231, 0.25
    %v282 = vmul.f32 %v238, 0.25
    %v283 = vmul.f32 %v245, 0.25
    %v284 = vmul.f32 %v252, 0.25
    %v285 = vmul.f32 %v259, 0.25
    %v286 = vmul.f32 %v266, 0.25
    %v287 = vld [vmem:[#allocation6] sm:$0xff]
    %289 = vst [vmem:[#allocation1] ss:$2 sm:$0xff] %v287
    %v290 = vld.sshfl [vmem:[#allocation1] sm:$0xff pattern:$0x75316420]
    %v291 = vld.sshfl [vmem:[#allocation1 + $0x8] sm:$0xff pattern:$0x75316420]
    %v294 = vsel %vm126, %v290, 0.0
    %v295 = vrot.slane %v294, 4
    %v296 = vadd.f32 %v294, %v295
    %v297 = vrot.slane %v296, 2
    %v298 = vadd.f32 %v296, %v297
    %v299 = vrot.slane %v298, 1
    %v300 = vadd.f32 %v298, %v299
    %v301 = vsel %vm126, %v291, 0.0
    %v302 = vrot.slane %v301, 4
    %v303 = vadd.f32 %v301, %v302
    %v304 = vrot.slane %v303, 2
    %v305 = vadd.f32 %v303, %v304
    %v306 = vrot.slane %v305, 1
    %v307 = vadd.f32 %v305, %v306
    %v308 = vmul.f32 %v300, 0.25
    %v309 = vmul.f32 %v307, 0.25
    %vm330 = vcmask 1041409
    %v331 = vsel %vm330, %v269, %v267
    %vm332 = vcmask 1042434
    %v333 = vsel %vm332, %v271, %v331
    %vm334 = vcmask 1043459
    %v335 = vsel %vm334, %v273, %v333
    %vm336 = vcmask 1044484
    %v337 = vsel %vm336, %v275, %v335
    %vm338 = vcmask 1045509
    %v339 = vsel %vm338, %v277, %v337
    %vm340 = vcmask 1046534
    %v341 = vsel %vm340, %v279, %v339
    %vm342 = vcmask 1047559
    %v343 = vsel %vm342, %v281, %v341
    %v344 = vsel %vm330, %v270, %v268
    %v345 = vsel %vm332, %v272, %v344
    %v346 = vsel %vm334, %v274, %v345
    %v347 = vsel %vm336, %v276, %v346
    %v348 = vsel %vm338, %v278, %v347
    %v349 = vsel %vm340, %v280, %v348
    %v350 = vsel %vm342, %v282, %v349
    %v351 = vsel %vm330, %v285, %v283
    %v352 = vsel %vm330, %v286, %v284
    %357 = vst [vmem:[#allocation2] sm:$0xff] %v343
    %358 = vst [vmem:[#allocation2 + $0x8] sm:$0xff] %v350
    %359 = vst [vmem:[#allocation2 + $0x10] sm:$0x3] %v351
    %360 = vst [vmem:[#allocation2 + $0x18] sm:$0x3] %v352
    %v363 = vrot.slane %v309, 7
    %vm364 = vcmask 1040384
    %v365 = vsel %vm364, %v308, %v363
    %v367 = vlaneseq
    %vm368 = vcmp.ge.s32.totalorder %v367, 0
    %vm369 = vcmp.lt.s32.totalorder %v367, 256
    %vm370 = vmand %vm368, %vm369
    %s371 = scalar_lea.vmem [#allocation2], 18
    %372 = vst.msk [vmem:[%s371] ss:$8 sm:$0x3] %vm370, %v365
    %373 = vst.msk [vmem:[%s371] ss:$8 sm:$0x0] %vm370, %v365
    %v374 = vld [vmem:[#allocation2] sm:$0xfe]
    %v375 = vld [vmem:[#allocation2 + $0x8] sm:$0xfe]
    %v376 = vld [vmem:[#allocation2 + $0x10] sm:$0x7]
    %v377 = vld [vmem:[#allocation2 + $0x18] sm:$0x7]
    %v378 = vsel %vm332, %v269, %v267
    %v379 = vsel %vm334, %v271, %v378
    %v380 = vsel %vm336, %v273, %v379
    %v381 = vsel %vm338, %v275, %v380
    %v382 = vsel %vm340, %v277, %v381
    %v383 = vsel %vm342, %v279, %v382
    %v384 = vsel %vm332, %v270, %v268
    %v385 = vsel %vm334, %v272, %v384
    %v386 = vsel %vm336, %v274, %v385
    %v387 = vsel %vm338, %v276, %v386
    %v388 = vsel %vm340, %v278, %v387
    %v389 = vsel %vm342, %v280, %v388
    %v390 = vsel %vm330, %v283, %v281
    %v391 = vsel %vm332, %v285, %v390
    %v392 = vsel %vm330, %v284, %v282
    %v393 = vsel %vm332, %v286, %v392
    %v398 = vsub.f32 %v374, %v383
    %v399 = vsub.f32 %v375, %v389
    %v400 = vsub.f32 %v376, %v391
    %v401 = vsub.f32 %v377, %v393
    %v402 = vand.u32 2147483647, %v398
    %v403 = vand.u32 2147483647, %v399
    %v404 = vand.u32 2147483647, %v400
    %v405 = vand.u32 2147483647, %v401
    %v406 = vxor.u32 %v402, 2147483648
    %v407 = vxor.u32 %v403, 2147483648
    %v408 = vxor.u32 %v404, 2147483648
    %v409 = vxor.u32 %v405, 2147483648
    %v410 = vmul.f32 %v406, 1.442695
    %v411 = vpow.pop %v410
    %v412 = vmul.f32 %v407, 1.442695
    %v413 = vpow.pop %v412
    %v414 = vmul.f32 %v408, 1.442695
    %v415 = vpow.pop %v414
    %v416 = vmul.f32 %v409, 1.442695
    %v417 = vpow.pop %v416
    %v418 = vadd.f32 %v411, 1.0
    %v419 = vadd.f32 %v413, 1.0
    %v420 = vadd.f32 %v415, 1.0
    %v421 = vadd.f32 %v417, 1.0
    %v422 = vrcp.pop %v418
    %v423 = vmul.f32 %v418, %v422
    %v424 = vsub.f32 1.0, %v423
    %v425 = vmul.f32 %v422, %v424
    %v426 = vadd.f32 %v422, %v425
    %vm427 = vweird.f32 %v418
    %vm428 = vweird.f32 %v422
    %vm429 = vmor %vm427, %vm428
    %v430 = vsel %vm429, %v422, %v426
    %v431 = vand.u32 2147483647, %v418
    %vm432 = vcmp.eq.f32.partialorder %v431, 8.507059e+37
    %v433 = vand.u32 %v418, 2147483648
    %v434 = vor.u32 1.1754944e-38, %v433
    %v435 = vsel %vm432, %v434, %v430
    %v436 = vmul.f32 1.0, %v435
    %v437 = vrcp.pop %v419
    %v438 = vmul.f32 %v419, %v437
    %v439 = vsub.f32 1.0, %v438
    %v440 = vmul.f32 %v437, %v439
    %v441 = vadd.f32 %v437, %v440
    %vm442 = vweird.f32 %v419
    %vm443 = vweird.f32 %v437
    %vm444 = vmor %vm442, %vm443
    %v445 = vsel %vm444, %v437, %v441
    %v446 = vand.u32 2147483647, %v419
    %vm447 = vcmp.eq.f32.partialorder %v446, 8.507059e+37
    %v448 = vand.u32 %v419, 2147483648
    %v449 = vor.u32 1.1754944e-38, %v448
    %v450 = vsel %vm447, %v449, %v445
    %v451 = vmul.f32 1.0, %v450
    %v452 = vrcp.pop %v420
    %v453 = vmul.f32 %v420, %v452
    %v454 = vsub.f32 1.0, %v453
    %v455 = vmul.f32 %v452, %v454
    %v456 = vadd.f32 %v452, %v455
    %vm457 = vweird.f32 %v420
    %vm458 = vweird.f32 %v452
    %vm459 = vmor %vm457, %vm458
    %v460 = vsel %vm459, %v452, %v456
    %v461 = vand.u32 2147483647, %v420
    %vm462 = vcmp.eq.f32.partialorder %v461, 8.507059e+37
    %v463 = vand.u32 %v420, 2147483648
    %v464 = vor.u32 1.1754944e-38, %v463
    %v465 = vsel %vm462, %v464, %v460
    %v466 = vmul.f32 1.0, %v465
    %v467 = vrcp.pop %v421
    %v468 = vmul.f32 %v421, %v467
    %v469 = vsub.f32 1.0, %v468
    %v470 = vmul.f32 %v467, %v469
    %v471 = vadd.f32 %v467, %v470
    %vm472 = vweird.f32 %v421
    %vm473 = vweird.f32 %v467
    %vm474 = vmor %vm472, %vm473
    %v475 = vsel %vm474, %v467, %v471
    %v476 = vand.u32 2147483647, %v421
    %vm477 = vcmp.eq.f32.partialorder %v476, 8.507059e+37
    %v478 = vand.u32 %v421, 2147483648
    %v479 = vor.u32 1.1754944e-38, %v478
    %v480 = vsel %vm477, %v479, %v475
    %v481 = vmul.f32 1.0, %v480
    %s482 = smul.u32 0, 10
    %v483 = vlaneseq
    %v484 = vshrl.u32 %v483, 7
    %v485 = vadd.s32 %v484, 8
    %v486 = vstv %s482
    %v487 = vadd.s32 %v486, %v484
    %v488 = vadd.s32 %v486, %v485
    %vm489 = vcmp.eq.s32.totalorder %v487, 9
    %vm490 = vcmp.eq.s32.totalorder %v488, 9
    %v491 = vsel %vm489, 1, 0
    %v492 = vsel %vm490, 1, 0
    %vm493 = vcmp.eq.s32.totalorder %v491, 1
    %vm494 = vcmp.eq.s32.totalorder %v492, 1
    %vm499 = vcmask 1046528
    %v500 = vrot.slane %v436, 1
    %v501 = vrot.slane %v466, 1
    %v502 = vsel %vm499, %v500, %v501
    %v503 = vrot.slane %v451, 1
    %v504 = vrot.slane %v481, 1
    %v505 = vsel %vm499, %v503, %v504
    %v510 = vsel %vm493, 1.0, %v502
    %v511 = vsel %vm493, 1.0, %v505
    %v512 = vsel %vm494, 1.0, %v501
    %v513 = vsel %vm494, 1.0, %v504
    %v518 = vrot.slane %v511, 7
    %v519 = vrot.slane %v513, 7
    %v520 = vsel %vm364, %v510, %v518
    %v521 = vsel %vm330, %v510, %v518
    %v522 = vrot.slane %v521, 1
    %v523 = vsel %vm332, %v510, %v518
    %v524 = vrot.slane %v523, 2
    %v525 = vsel %vm334, %v510, %v518
    %v526 = vrot.slane %v525, 3
    %v527 = vsel %vm336, %v510, %v518
    %v528 = vrot.slane %v527, 4
    %v529 = vsel %vm338, %v510, %v518
    %v530 = vrot.slane %v529, 5
    %v531 = vsel %vm340, %v510, %v518
    %v532 = vrot.slane %v531, 6
    %v533 = vsel %vm499, %v518, %v510
    %v534 = vrot.slane %v533, 7
    %v535 = vsel %vm364, %v512, %v519
    %v536 = vsel %vm330, %v512, %v519
    %v537 = vrot.slane %v536, 1
    %v538 = vperm.slane %v520, 0
    %v539 = vperm.slane %v520, 1
    %v540 = vperm.slane %v522, 0
    %v541 = vperm.slane %v522, 1
    %v542 = vperm.slane %v524, 0
    %v543 = vperm.slane %v524, 1
    %v544 = vperm.slane %v526, 0
    %v545 = vperm.slane %v526, 1
    %v546 = vperm.slane %v528, 0
    %v547 = vperm.slane %v528, 1
    %v548 = vperm.slane %v530, 0
    %v549 = vperm.slane %v530, 1
    %v550 = vperm.slane %v532, 0
    %v551 = vperm.slane %v532, 1
    %v552 = vperm.slane %v534, 0
    %v553 = vperm.slane %v534, 1
    %v554 = vperm.slane %v535, 0
    %v555 = vperm.slane %v535, 1
    %v556 = vperm.slane %v537, 0
    %v557 = vperm.slane %v537, 1
    %v558 = vrot.slane %v539, 4
    %v559 = vrot.slane %v541, 4
    %v560 = vrot.slane %v543, 4
    %v561 = vrot.slane %v545, 4
    %v562 = vrot.slane %v547, 4
    %v563 = vrot.slane %v549, 4
    %v564 = vrot.slane %v551, 4
    %v565 = vrot.slane %v553, 4
    %v566 = vrot.slane %v555, 4
    %v567 = vrot.slane %v557, 4
    %v568 = vsel %vm126, %v538, %v558
    %v569 = vsel %vm126, %v540, %v559
    %v570 = vsel %vm126, %v542, %v560
    %v571 = vsel %vm126, %v544, %v561
    %v572 = vsel %vm126, %v546, %v562
    %v573 = vsel %vm126, %v548, %v563
    %v574 = vsel %vm126, %v550, %v564
    %v575 = vsel %vm126, %v552, %v565
    %v576 = vsel %vm126, %v554, %v566
    %v577 = vsel %vm126, %v556, %v567
    %v588 = vmul.f32 %v53, %v568
    %v589 = vmul.f32 %v54, %v569
    %v590 = vmul.f32 %v55, %v570
    %v591 = vmul.f32 %v56, %v571
    %v592 = vmul.f32 %v57, %v572
    %v593 = vmul.f32 %v58, %v573
    %v594 = vmul.f32 %v59, %v574
    %v595 = vmul.f32 %v60, %v575
    %v596 = vmul.f32 %v61, %v576
    %v597 = vmul.f32 %v62, %v577
    %598 = vst [vmem:[#allocation8] sm:$0xff] %v588
    %599 = vst [vmem:[#allocation8 + $0x8] sm:$0xff] %v589
    %600 = vst [vmem:[#allocation8 + $0x10] sm:$0xff] %v590
    %601 = vst [vmem:[#allocation8 + $0x18] sm:$0xff] %v591
    %602 = vst [vmem:[#allocation8 + $0x20] sm:$0xff] %v592
    %603 = vst [vmem:[#allocation8 + $0x28] sm:$0xff] %v593
    %604 = vst [vmem:[#allocation8 + $0x30] sm:$0xff] %v594
    %605 = vst [vmem:[#allocation8 + $0x38] sm:$0xff] %v595
    %606 = vst [vmem:[#allocation8 + $0x40] sm:$0xff] %v596
    %607 = vst [vmem:[#allocation8 + $0x48] sm:$0xff] %v597
    // Predicated region
    $region18: #{tpu_custom_call.1} parent=1 // pred_check
      _
    $region19: #{tpu_custom_call.1} parent=1 // pred_check_branch
      %609 = sbr.rel (0) target = $region21
    $region20: #{tpu_custom_call.1} parent=1 // pred_region
      %611 = vsyncadd [#allocation5], 0
      %s612 = sshll.u32 [#allocation8], 4
      %s613 = int_to_ptr.vmem [resolvable:$true] %s612
      %s614 = sshll.u32 %s2, 4
      %s615 = int_to_ptr.hbm [resolvable:$true] %s614
      %620 = dma.vmem_to_hbm [thread:$0]  %s613, 1280, %s615, [#allocation5], 128, 128, 8
    $region21: #{tpu_custom_call.1} parent=1 // pred_fallthru
      _
    // Predicated region
    $region22: #{tpu_custom_call.1} parent=1 // pred_check
      _
    $region23: #{tpu_custom_call.1} parent=1 // pred_check_branch
      %622 = sbr.rel (0) target = $region25
    $region24: #{tpu_custom_call.1} parent=1 // pred_region
      %624 = dma.done [#allocation5], 1280
    $region25: #{tpu_custom_call.1} parent=1 // pred_fallthru
      _
    %625 = vsyncpa [#allocation4], 1
    %626 = vsyncpa [#allocation7], 1
    %627 = vsyncpa [#allocation5], 1

</llo_original>
